<compile_context>
chip_gen: v6e
topology: v6e:2x2x1
jax: 0.10.0
libtpu: 0.0.40
codegen_flags: <defaults>
</compile_context>

<pallas_src>
import numpy as np

import jax
import jax.numpy as jnp
from jax.experimental import pallas as pl
from jax.experimental.pallas import tpu as pltpu

DEL_ID = 3
PAD_ID = 0
STOP_ID = 5


def _round_up(x, m):
    return ((x + m - 1) // m) * m


def _pad_time(x, t_max):
    t = x.shape[0]
    if t == t_max:
        return x
    return jnp.pad(x, ((0, t_max - t), (0, 0), (0, 0)))


# --------------------------------------------------------------------------
# Kernel 1: pair of independent LSTM recurrences, time loop in-kernel.
#   gx_ref : (T, B, 4H) bf16  precomputed x@W_ih.T + b (time-major)
#   whh_ref: (H, 4H)    bf16  recurrent weights
#   out_ref: (T, B, H)  bf16  per-step hidden states (rows >= n are garbage,
#                             never read downstream)
# grid=(2,) selects the LSTM (edits / words) via the leading stacked dim.
# --------------------------------------------------------------------------
def _lstm_pair_kernel(lens_ref, gx_ref, h0_ref, c0_ref, whh_ref,
                      out_ref, hT_ref, cT_ref, h_scr, c_scr):
    H = hT_ref.shape[-1]
    n = lens_ref[pl.program_id(0)]          # true length of this sequence

    h_scr[...] = h0_ref[...]
    c_scr[...] = c0_ref[...]

    def step(t, carry):
        h = h_scr[...]
        c = c_scr[...]
        # bf16 MXU operands, f32 accumulation -- this dot is the serial
        # critical path of the recurrence.
        gates = gx_ref[t].astype(jnp.float32) + jnp.dot(
            h.astype(jnp.bfloat16), whh_ref[...],
            preferred_element_type=jnp.float32)
        # NOTE: keep H a multiple of 128 so the gate slices stay lane-aligned.
        i = jax.nn.sigmoid(gates[:, 0 * H:1 * H])   # PyTorch gate order i,f,g,o
        f = jax.nn.sigmoid(gates[:, 1 * H:2 * H])
        g = jnp.tanh(gates[:, 2 * H:3 * H])
        o = jax.nn.sigmoid(gates[:, 3 * H:4 * H])
        c_new = f * c + i * g
        h_new = o * jnp.tanh(c_new)
        h_scr[...] = h_new
        c_scr[...] = c_new
        out_ref[t] = h_new.astype(out_ref.dtype)
        return carry

    # Only iterate over the true length: padded steps are skipped entirely.
    jax.lax.fori_loop(0, n, step, 0)

    hT_ref[...] = h_scr[...]                 # finals written once, not per step
    cT_ref[...] = c_scr[...]


def lstm_pair_forward(lengths, gates_x, h0, c0, whhT_bf):
    """Run both LSTMs (stacked on a leading axis of size 2) in one pallas_call."""
    n_lstm, T, B, G = gates_x.shape
    H = h0.shape[-1]
    # TODO(synk): for long T / large B, add a time-chunk pipeline
    # (pltpu.emit_pipeline over T-chunks with h/c carried in scratch) so the
    # full-T blocks do not exhaust v7x's 64 MiB VMEM.
    return pl.pallas_call(
        _lstm_pair_kernel,
        out_shape=(jax.ShapeDtypeStruct((n_lstm, T, B, H), jnp.bfloat16),
                   jax.ShapeDtypeStruct((n_lstm, B, H), jnp.float32),
                   jax.ShapeDtypeStruct((n_lstm, B, H), jnp.float32)),
        grid_spec=pltpu.PrefetchScalarGridSpec(
            num_scalar_prefetch=1,
            grid=(n_lstm,),
            in_specs=[pl.BlockSpec((None, T, B, G), lambda p, lens: (p, 0, 0, 0)),
                      pl.BlockSpec((B, H), lambda p, lens: (0, 0)),
                      pl.BlockSpec((B, H), lambda p, lens: (0, 0)),
                      pl.BlockSpec((None, H, G), lambda p, lens: (p, 0, 0))],
            out_specs=[pl.BlockSpec((None, T, B, H), lambda p, lens: (p, 0, 0, 0)),
                       pl.BlockSpec((None, B, H), lambda p, lens: (p, 0, 0)),
                       pl.BlockSpec((None, B, H), lambda p, lens: (p, 0, 0))],
            scratch_shapes=[pltpu.VMEM((B, H), jnp.float32),
                            pltpu.VMEM((B, H), jnp.float32)]),
        compiler_params=pltpu.CompilerParams(
            dimension_semantics=("parallel",)),    # 2 TCs on v7x
    )(lengths, gates_x, h0, c0, whhT_bf)


# --------------------------------------------------------------------------
# Kernel 2: attention scores + softmax + apply, tiled over the batch.
# The Wp projection is one large matmul in the wrapper.  Normalization is
# deferred until after p @ enc so the scale multiply touches (T,H), not (T,S).
# --------------------------------------------------------------------------
def _attn_kernel(key_ref, enc_ref, out_ref):
    key = key_ref[...]                       # (T, H) bf16
    enc = enc_ref[...]                       # (S, H) bf16
    logits = jax.lax.dot_general(key, enc, (((1,), (1,)), ((), ())),
                                 preferred_element_type=jnp.float32)   # (T, S)
    m = jnp.max(logits, axis=-1, keepdims=True)
    p = jnp.exp(logits - m)
    denom = jnp.sum(p, axis=-1, keepdims=True)
    applied = jnp.dot(p.astype(jnp.bfloat16), enc,
                      preferred_element_type=jnp.float32)              # (T, H)
    out_ref[...] = (applied * pl.reciprocal(denom, approx=True)
                    ).astype(out_ref.dtype)


def attention_apply(output_edits_bf, enc_bf, attn_proj_w_bf):
    """attn = softmax((oe @ Wp.T) @ enc.T) @ enc, batched, B-tiled."""
    B, T, H = output_edits_bf.shape
    S = enc_bf.shape[1]
    # Hoisted projection: one (B*T,H)x(H,H) matmul in bf16, f32 accumulate.
    key = jnp.einsum("bth,gh->btg", output_edits_bf, attn_proj_w_bf,
                     preferred_element_type=jnp.float32).astype(jnp.bfloat16)
    return pl.pallas_call(
        _attn_kernel,
        out_shape=jax.ShapeDtypeStruct((B, T, H), jnp.bfloat16),
        grid_spec=pltpu.PrefetchScalarGridSpec(
            num_scalar_prefetch=0,
            grid=(B,),
            in_specs=[pl.BlockSpec((None, T, H), lambda b: (b, 0, 0)),
                      pl.BlockSpec((None, S, H), lambda b: (b, 0, 0))],
            out_specs=pl.BlockSpec((None, T, H), lambda b: (b, 0, 0))),
        compiler_params=pltpu.CompilerParams(
            dimension_semantics=("parallel",)),
    )(key, enc_bf)


# --------------------------------------------------------------------------
# Kernel 3: row-tiled MLP (tanh) + output projection + log_softmax.
# Weights stay resident (constant index_map); rows are tiled so the pipeline
# overlaps DMA of the next row tile with MXU work.  Vocab dim pre-padded to a
# multiple of 128 (lane-dense stores); padded columns carry a -1e30 bias so
# the log-softmax normalization ignores them.
# --------------------------------------------------------------------------
def _mlp_logsoftmax_kernel(feat_ref, w1T_ref, b1_ref, w2T_ref, b2_ref, out_ref):
    h = jnp.tanh(jnp.dot(feat_ref[...], w1T_ref[...],
                         preferred_element_type=jnp.float32) + b1_ref[...])
    logits = jnp.dot(h.astype(jnp.bfloat16), w2T_ref[...],
                     preferred_element_type=jnp.float32) + b2_ref[...]
    m = jnp.max(logits, axis=-1, keepdims=True)
    lse = m + jnp.log(jnp.sum(jnp.exp(logits - m), axis=-1, keepdims=True))
    out_ref[...] = logits - lse


def mlp_out_logsoftmax(feats_bf, w1T_bf, b1_row, w2T_bf, b2_row, v_out):
    """log_softmax(out(tanh(attn_MLP(feats)))) over rows of `feats` (bf16)."""
    N, F4 = feats_bf.shape
    E = w1T_bf.shape[1]
    Vp = w2T_bf.shape[1]

    # Row tile: as large as a conservative VMEM budget allows (v6e/v5e data:
    # 512-row tiles approach the HBM roofline; the budget keeps v7x safe).
    if N >= 512:
        TN = 512
    elif N >= 256:
        TN = 256
    elif N >= 128:
        TN = 128
    else:
        TN = _round_up(N, 8)

    def vmem_need(tn):
        return (2 * tn * F4 * 2          # double-buffered bf16 input tile
                + 2 * tn * Vp * 4        # double-buffered f32 output tile
                + (F4 * E + E * Vp) * 2  # resident bf16 weights
                + (E + Vp) * 4)          # biases

    while TN > 128 and vmem_need(TN) > (40 << 20):
        TN //= 2

    Npad = _round_up(N, TN)
    if Npad != N:
        feats_bf = jnp.pad(feats_bf, ((0, Npad - N), (0, 0)))

    vmem_limit = int(min(max(vmem_need(TN) + (8 << 20), 16 << 20), 48 << 20))

    out = pl.pallas_call(
        _mlp_logsoftmax_kernel,
        out_shape=jax.ShapeDtypeStruct((Npad, Vp), jnp.float32),
        grid_spec=pltpu.PrefetchScalarGridSpec(
            num_scalar_prefetch=0,
            grid=(Npad // TN,),
            in_specs=[pl.BlockSpec((TN, F4), lambda i: (i, 0)),
                      pl.BlockSpec((F4, E), lambda i: (0, 0)),
                      pl.BlockSpec((1, E), lambda i: (0, 0)),
                      pl.BlockSpec((E, Vp), lambda i: (0, 0)),
                      pl.BlockSpec((1, Vp), lambda i: (0, 0))],
            out_specs=pl.BlockSpec((TN, Vp), lambda i: (i, 0))),
        compiler_params=pltpu.CompilerParams(
            dimension_semantics=("parallel",),
            vmem_limit_bytes=vmem_limit),
    )(feats_bf, w1T_bf, b1_row, w2T_bf, b2_row)
    # TODO(synk): for very large vocabularies, tile Vp with an online
    # logsumexp and keep the (E,Vp) weight single-buffered (v7x 64 MiB VMEM).
    return out[:N, :v_out]


# --------------------------------------------------------------------------
# Counter / early-break logic of the PyTorch teacher-forcing loop.
# --------------------------------------------------------------------------
def compute_nsteps(ie_np, s_org_len, s_simp_len):
    """Host-side: number of decode steps (data-dependent early break)."""
    gold = ie_np[:, 1:]
    ind_del = (gold == 2) | (gold == 3)
    ind_ins = (gold != DEL_ID) & (gold != STOP_ID) & (gold != PAD_ID)
    inc_del = np.cumsum(ind_del.astype(np.int64), axis=1)
    inc_ins = np.cumsum(ind_ins.astype(np.int64), axis=1)
    nsteps = gold.shape[1]
    for t in range(gold.shape[1]):
        if (inc_del[:, t] >= s_org_len).any() or (inc_ins[:, t] >= s_simp_len).any():
            nsteps = t + 1
            break
    return nsteps


def compute_counters_device(input_edits, nsteps):
    """Device-side counters used as gather indices at each step."""
    gold = input_edits[:, 1:1 + nsteps]
    ind_del = ((gold == 2) | (gold == 3)).astype(jnp.int32)
    ind_ins = ((gold != DEL_ID) & (gold != STOP_ID)
               & (gold != PAD_ID)).astype(jnp.int32)
    cnt_del = jnp.cumsum(ind_del, axis=1) - ind_del   # counter value at step t
    cnt_ins = jnp.cumsum(ind_ins, axis=1) - ind_ins
    return cnt_del, cnt_ins


# --------------------------------------------------------------------------
# One-time parameter preparation (pre-transpose / pre-cast / pad vocab).
# --------------------------------------------------------------------------
def prepare_params(params):
    emb = params["embedding"]
    wih_e, whh_e, bih_e, bhh_e = params["rnn_edits"]
    wih_w, whh_w, bih_w, bhh_w = params["rnn_words"]
    H = whh_e.shape[1]
    E = wih_e.shape[1]
    V = params["out_w"].shape[0]
    Vp = _round_up(V, 128)
    out_wT = params["out_w"].T                       # (E, V)
    out_b = params["out_b"]
    if Vp != V:
        out_wT = jnp.pad(out_wT, ((0, 0), (0, Vp - V)))
        out_b = jnp.pad(out_b, (0, Vp - V), constant_values=-1e30)
    return {
        "H": H, "E": E, "V": V,
        "emb_bf": emb.astype(jnp.bfloat16),
        "wih_e_bf": wih_e.astype(jnp.bfloat16),
        "wih_w_bf": wih_w.astype(jnp.bfloat16),
        "bias_e": (bih_e + bhh_e).astype(jnp.float32),
        "bias_w": (bih_w + bhh_w).astype(jnp.float32),
        "whhT_bf": jnp.stack([whh_e.T, whh_w.T]).astype(jnp.bfloat16),
        "attn_proj_w_bf": params["attn_proj_w"].astype(jnp.bfloat16),
        "mlp_w1T_bf": params["attn_mlp_w"].T.astype(jnp.bfloat16),   # (4H, E)
        "mlp_b1": params["attn_mlp_b"][None, :].astype(jnp.float32),
        "out_wT_bf": out_wT.astype(jnp.bfloat16),                    # (E, Vp)
        "out_b_row": out_b[None, :].astype(jnp.float32),             # (1, Vp)
    }


# --------------------------------------------------------------------------
# Full forward (teacher-forcing branch of EditDecoderRNN.forward)
# --------------------------------------------------------------------------
def edit_decoder_forward(prep, input_edits, hidden_org, encoder_outputs_org,
                         org_ids, simp_sent):
    B, T = input_edits.shape
    Ts = simp_sent.shape[1]
    H = prep["H"]
    h0 = hidden_org[0][0]            # (B, H)  (n_layers = 1)
    c0 = hidden_org[1][0]

    x_e = jnp.take(prep["emb_bf"], input_edits, axis=0)     # (B, T, E)  bf16
    x_w = jnp.take(prep["emb_bf"], simp_sent, axis=0)       # (B, Ts, E) bf16

    # Hoisted input projections: one large matmul per LSTM (bf16 operands,
    # f32 accumulation), emitted time-major and stored bf16 for the kernel.
    gx_e = (jnp.einsum("bte,ge->tbg", x_e, prep["wih_e_bf"],
                       preferred_element_type=jnp.float32) + prep["bias_e"])
    gx_w = (jnp.einsum("bte,ge->tbg", x_w, prep["wih_w_bf"],
                       preferred_element_type=jnp.float32) + prep["bias_w"])

    T_max = max(T, Ts)
    gx = jnp.stack([_pad_time(gx_e, T_max),
                    _pad_time(gx_w, T_max)]).astype(jnp.bfloat16)   # (2,Tm,B,4H)
    lengths = jnp.array([T, Ts], dtype=jnp.int32)

    out_seq, hT, cT = lstm_pair_forward(lengths, gx, h0, c0, prep["whhT_bf"])
    # TODO(synk): write batch-major hidden states directly from the kernel to
    # drop these (bf16) relayouts between the Pallas calls.
    output_edits = jnp.transpose(out_seq[0, :T], (1, 0, 2))    # (B, T, H)  bf16
    output_words = jnp.transpose(out_seq[1, :Ts], (1, 0, 2))   # (B, Ts, H) bf16

    enc_bf = encoder_outputs_org.astype(jnp.bfloat16)
    attn_applied = attention_apply(output_edits, enc_bf, prep["attn_proj_w_bf"])

    # nsteps determines output shapes -> host scalar; counters stay on device.
    nsteps = compute_nsteps(np.asarray(input_edits), org_ids.shape[1],
                            simp_sent.shape[1])
    cnt_del, cnt_ins = compute_counters_device(input_edits, nsteps)

    c = jnp.take_along_axis(enc_bf, cnt_del[..., None], axis=1)
    c_word = jnp.take_along_axis(output_words, cnt_ins[..., None], axis=1)
    feats = jnp.concatenate([output_edits[:, :nsteps],
                             attn_applied[:, :nsteps], c, c_word], axis=-1)

    logp = mlp_out_logsoftmax(feats.reshape(B * nsteps, 4 * H),
                              prep["mlp_w1T_bf"], prep["mlp_b1"],
                              prep["out_wT_bf"], prep["out_b_row"], prep["V"])
    decoder_out = logp.reshape(B, nsteps, prep["V"])
    hidden_edits = (hT[0][None], cT[0][None])
    return decoder_out, hidden_edits


# --------------------------------------------------------------------------
# Pure-JAX f32 reference (correctness check only)
# --------------------------------------------------------------------------
def reference_forward(params, input_edits, hidden_org, enc, org_ids, simp_sent):
    emb = params["embedding"]
    H = hidden_org[0].shape[-1]
    h0, c0 = hidden_org[0][0], hidden_org[1][0]

    def lstm_ref(x, w_ih, w_hh, b_ih, b_hh):
        def step(carry, x_t):
            h, c = carry
            gates = x_t @ w_ih.T + h @ w_hh.T + b_ih + b_hh
            i = jax.nn.sigmoid(gates[:, :H])
            f = jax.nn.sigmoid(gates[:, H:2 * H])
            g = jnp.tanh(gates[:, 2 * H:3 * H])
            o = jax.nn.sigmoid(gates[:, 3 * H:])
            c2 = f * c + i * g
            h2 = o * jnp.tanh(c2)
            return (h2, c2), h2
        (hT, cT), ys = jax.lax.scan(step, (h0, c0), jnp.transpose(x, (1, 0, 2)))
        return jnp.transpose(ys, (1, 0, 2)), hT, cT

    oe, hT_e, cT_e = lstm_ref(jnp.take(emb, input_edits, axis=0),
                              *params["rnn_edits"])
    ow, _, _ = lstm_ref(jnp.take(emb, simp_sent, axis=0), *params["rnn_words"])
    key = oe @ params["attn_proj_w"].T
    logits = jnp.einsum("bth,bsh->bts", key, enc)
    w = jax.nn.softmax(logits, axis=-1)
    applied = jnp.einsum("bts,bsh->bth", w, enc)

    nsteps = compute_nsteps(np.asarray(input_edits), org_ids.shape[1],
                            simp_sent.shape[1])
    cnt_del, cnt_ins = compute_counters_device(input_edits, nsteps)
    c = jnp.take_along_axis(enc, cnt_del[..., None], axis=1)
    c_word = jnp.take_along_axis(ow, cnt_ins[..., None], axis=1)
    feats = jnp.concatenate([oe[:, :nsteps], applied[:, :nsteps], c, c_word],
                            axis=-1)
    hmid = jnp.tanh(feats @ params["attn_mlp_w"].T + params["attn_mlp_b"])
    logits_out = hmid @ params["out_w"].T + params["out_b"]
    dec = jax.nn.log_softmax(logits_out, axis=-1)
    return dec, (hT_e[None], cT_e[None])


# --------------------------------------------------------------------------
# Deterministic parameter construction (shapes per EditDecoderRNN.__init__)
# --------------------------------------------------------------------------
def make_params(key, V, E, H):
    ks = jax.random.split(key, 13)
    s = 0.1

    def init(k, shape):
        return jax.random.normal(k, shape, jnp.float32) * s

    emb = init(ks[0], (V, E))
    return {
        "embedding": emb,
        "rnn_edits": (init(ks[1], (4 * H, E)), init(ks[2], (4 * H, H)),
                      init(ks[3], (4 * H,)), init(ks[4], (4 * H,))),
        "rnn_words": (init(ks[5], (4 * H, E)), init(ks[6], (4 * H, H)),
                      init(ks[7], (4 * H,)), init(ks[8], (4 * H,))),
        "attn_proj_w": init(ks[9], (H, H)),        # Linear(H, H, bias=False)
        "attn_mlp_w": init(ks[10], (E, 4 * H)),    # Linear(4H, E)
        "attn_mlp_b": init(ks[11], (E,)),
        "out_w": emb,                              # out.weight tied to embedding
        "out_b": init(ks[12], (V,)),
    }


if __name__ == "__main__":
    V, E, H = 128, 128, 128
    B, T, Ts, S = 2, 8, 8, 8          # batch, edit steps, simp_sent len, src len

    key = jax.random.PRNGKey(0)
    kp, k1, k2, k3, k4, k5, k6 = jax.random.split(key, 7)
    params = make_params(kp, V, E, H)
    prep = prepare_params(params)      # one-time weight transpose/cast/pad

    input_edits = jax.random.randint(k1, (B, T), 0, V, dtype=jnp.int32)
    simp_sent = jax.random.randint(k2, (B, Ts), 0, V, dtype=jnp.int32)
    org_ids = jax.random.randint(k3, (B, S), 0, V, dtype=jnp.int32)
    encoder_outputs_org = jax.random.normal(k4, (B, S, H), jnp.float32)
    hidden_org = (jax.random.normal(k5, (1, B, H), jnp.float32) * 0.1,
                  jax.random.normal(k6, (1, B, H), jnp.float32) * 0.1)

    dec_out, hidden_edits = edit_decoder_forward(
        prep, input_edits, hidden_org, encoder_outputs_org, org_ids, simp_sent)
    dec_out = jax.block_until_ready(dec_out)
    hidden_edits = jax.block_until_ready(hidden_edits)

    ref_out, ref_hidden = reference_forward(
        params, input_edits, hidden_org, encoder_outputs_org, org_ids, simp_sent)

    # bf16 matmul operands / activation storage (f32 accumulation) -> looser
    # tolerance than a pure-f32 pipeline.
    np.testing.assert_allclose(np.asarray(dec_out), np.asarray(ref_out),
                               rtol=3e-2, atol=3e-2)
    np.testing.assert_allclose(np.asarray(hidden_edits[0]),
                               np.asarray(ref_hidden[0]), rtol=3e-2, atol=3e-2)
    np.testing.assert_allclose(np.asarray(hidden_edits[1]),
                               np.asarray(ref_hidden[1]), rtol=3e-2, atol=3e-2)

    print("KERNEL_OK")
</pallas_src>

<mosaic_0001>
module attributes {stable_mosaic.version = 11 : i64} {
  func.func @_lstm_pair_kernel(%arg0: i32, %arg1: memref<2xi32, #tpu.memory_space<smem>>, %arg2: memref<1x8x2x512xbf16, #tpu.memory_space<vmem>>, %arg3: memref<2x128xf32, #tpu.memory_space<vmem>>, %arg4: memref<2x128xf32, #tpu.memory_space<vmem>>, %arg5: memref<1x128x512xbf16, #tpu.memory_space<vmem>>, %arg6: memref<1x8x2x128xbf16, #tpu.memory_space<vmem>>, %arg7: memref<1x2x128xf32, #tpu.memory_space<vmem>>, %arg8: memref<1x2x128xf32, #tpu.memory_space<vmem>>, %arg9: memref<2x128xf32, #tpu.memory_space<vmem>>, %arg10: memref<2x128xf32, #tpu.memory_space<vmem>>) attributes {dimension_semantics = [#tpu.dimension_semantics<parallel>], iteration_bounds = array<i64: 2>, scalar_prefetch = 1 : i64, scratch_operands = 2 : i64, tpu.core_type = #tpu.core_type<tc>, window_params = [{transform_indices = @transform_0, window_bounds = array<i64: 1, 8, 2, 512>}, {pipeline_mode = #tpu.pipeline_mode<synchronous>, transform_indices = @transform_1, window_bounds = array<i64: 2, 128>}, {pipeline_mode = #tpu.pipeline_mode<synchronous>, transform_indices = @transform_2, window_bounds = array<i64: 2, 128>}, {transform_indices = @transform_3, window_bounds = array<i64: 1, 128, 512>}, {transform_indices = @transform_4, window_bounds = array<i64: 1, 8, 2, 128>}, {transform_indices = @transform_5, window_bounds = array<i64: 1, 2, 128>}, {transform_indices = @transform_6, window_bounds = array<i64: 1, 2, 128>}]} {
    %0 = arith.index_cast %arg0 : i32 to index
    %1 = memref.load %arg1[%0] : memref<2xi32, #tpu.memory_space<smem>>
    %c0 = arith.constant 0 : index
    %c0_0 = arith.constant 0 : index
    %2 = vector.load %arg3[%c0, %c0_0] : memref<2x128xf32, #tpu.memory_space<vmem>>, vector<2x128xf32>
    %c0_1 = arith.constant 0 : index
    %c0_2 = arith.constant 0 : index
    %3 = vector.load %arg9[%c0_1, %c0_2] : memref<2x128xf32, #tpu.memory_space<vmem>>, vector<2x128xf32>
    tpu.vector_store %arg9[%c0_1, %c0_2], %2 {strides = array<i32>} : memref<2x128xf32, #tpu.memory_space<vmem>>, vector<2x128xf32>,
    %c0_3 = arith.constant 0 : index
    %c0_4 = arith.constant 0 : index
    %4 = vector.load %arg4[%c0_3, %c0_4] : memref<2x128xf32, #tpu.memory_space<vmem>>, vector<2x128xf32>
    %c0_5 = arith.constant 0 : index
    %c0_6 = arith.constant 0 : index
    %5 = vector.load %arg10[%c0_5, %c0_6] : memref<2x128xf32, #tpu.memory_space<vmem>>, vector<2x128xf32>
    tpu.vector_store %arg10[%c0_5, %c0_6], %4 {strides = array<i32>} : memref<2x128xf32, #tpu.memory_space<vmem>>, vector<2x128xf32>,
    %c0_i32 = arith.constant 0 : i32
    %c0_i32_7 = arith.constant 0 : i32
    %6 = arith.subi %1, %c0_i32_7 : i32
    %7 = arith.addi %c0_i32_7, %6 : i32
    %c1_i32 = arith.constant 1 : i32
    scf.for %arg11 = %c0_i32_7 to %7 step %c1_i32  : i32 {
      %c0_18 = arith.constant 0 : index
      %c0_19 = arith.constant 0 : index
      %16 = vector.load %arg9[%c0_18, %c0_19] : memref<2x128xf32, #tpu.memory_space<vmem>>, vector<2x128xf32>
      %c0_20 = arith.constant 0 : index
      %c0_21 = arith.constant 0 : index
      %17 = vector.load %arg10[%c0_20, %c0_21] : memref<2x128xf32, #tpu.memory_space<vmem>>, vector<2x128xf32>
      %c0_22 = arith.constant 0 : index
      %18 = arith.index_cast %arg11 : i32 to index
      %c0_23 = arith.constant 0 : index
      %c0_24 = arith.constant 0 : index
      %19 = vector.load %arg2[%c0_22, %18, %c0_23, %c0_24] : memref<1x8x2x512xbf16, #tpu.memory_space<vmem>>, vector<1x1x2x512xbf16>
      %20 = vector.shape_cast %19 : vector<1x1x2x512xbf16> to vector<2x512xbf16>
      %21 = arith.extf %20 : vector<2x512xbf16> to vector<2x512xf32>
      %22 = arith.truncf %16 : vector<2x128xf32> to vector<2x128xbf16>
      %c0_25 = arith.constant 0 : index
      %c0_26 = arith.constant 0 : index
      %c0_27 = arith.constant 0 : index
      %23 = vector.load %arg5[%c0_25, %c0_26, %c0_27] : memref<1x128x512xbf16, #tpu.memory_space<vmem>>, vector<1x128x512xbf16>
      %24 = vector.shape_cast %23 : vector<1x128x512xbf16> to vector<128x512xbf16>
      %cst = arith.constant dense<0.000000e+00> : vector<2x512xf32>
      %25 = tpu.matmul %22, %24, %cst {dimension_numbers = #tpu.dot_dimension_numbers<[1], [0], [0], [1], [0, 0, 1, 1], [], []>} : vector<2x128xbf16>, vector<128x512xbf16>, vector<2x512xf32> -> vector<2x512xf32>
      %26 = arith.addf %21, %25 : vector<2x512xf32>
      %27 = vector.extract_strided_slice %26 {offsets = [0, 0], sizes = [2, 128], strides = [1, 1]} : vector<2x512xf32> to vector<2x128xf32>
      %28 = arith.negf %27 : vector<2x128xf32>
      %29 = math.exp %28 : vector<2x128xf32>
      %cst_28 = arith.constant 1.000000e+00 : f32
      %30 = vector.broadcast %cst_28 : f32 to vector<2x128xf32>
      %31 = arith.addf %30, %29 : vector<2x128xf32>
      %32 = arith.divf %30, %31 : vector<2x128xf32>
      %33 = vector.extract_strided_slice %26 {offsets = [0, 128], sizes = [2, 128], strides = [1, 1]} : vector<2x512xf32> to vector<2x128xf32>
      %34 = arith.negf %33 : vector<2x128xf32>
      %35 = math.exp %34 : vector<2x128xf32>
      %cst_29 = arith.constant 1.000000e+00 : f32
      %36 = vector.broadcast %cst_29 : f32 to vector<2x128xf32>
      %37 = arith.addf %36, %35 : vector<2x128xf32>
      %38 = arith.divf %36, %37 : vector<2x128xf32>
      %39 = vector.extract_strided_slice %26 {offsets = [0, 256], sizes = [2, 128], strides = [1, 1]} : vector<2x512xf32> to vector<2x128xf32>
      %40 = math.tanh %39 : vector<2x128xf32>
      %41 = vector.extract_strided_slice %26 {offsets = [0, 384], sizes = [2, 128], strides = [1, 1]} : vector<2x512xf32> to vector<2x128xf32>
      %42 = arith.negf %41 : vector<2x128xf32>
      %43 = math.exp %42 : vector<2x128xf32>
      %cst_30 = arith.constant 1.000000e+00 : f32
      %44 = vector.broadcast %cst_30 : f32 to vector<2x128xf32>
      %45 = arith.addf %44, %43 : vector<2x128xf32>
      %46 = arith.divf %44, %45 : vector<2x128xf32>
      %47 = arith.mulf %38, %17 : vector<2x128xf32>
      %48 = arith.mulf %32, %40 : vector<2x128xf32>
      %49 = arith.addf %47, %48 : vector<2x128xf32>
      %50 = math.tanh %49 : vector<2x128xf32>
      %51 = arith.mulf %46, %50 : vector<2x128xf32>
      %c0_31 = arith.constant 0 : index
      %c0_32 = arith.constant 0 : index
      %52 = vector.load %arg9[%c0_31, %c0_32] : memref<2x128xf32, #tpu.memory_space<vmem>>, vector<2x128xf32>
      tpu.vector_store %arg9[%c0_31, %c0_32], %51 {strides = array<i32>} : memref<2x128xf32, #tpu.memory_space<vmem>>, vector<2x128xf32>,
      %c0_33 = arith.constant 0 : index
      %c0_34 = arith.constant 0 : index
      %53 = vector.load %arg10[%c0_33, %c0_34] : memref<2x128xf32, #tpu.memory_space<vmem>>, vector<2x128xf32>
      tpu.vector_store %arg10[%c0_33, %c0_34], %49 {strides = array<i32>} : memref<2x128xf32, #tpu.memory_space<vmem>>, vector<2x128xf32>,
      %54 = arith.truncf %51 : vector<2x128xf32> to vector<2x128xbf16>
      %c0_35 = arith.constant 0 : index
      %55 = arith.index_cast %arg11 : i32 to index
      %c0_36 = arith.constant 0 : index
      %c0_37 = arith.constant 0 : index
      %56 = vector.load %arg6[%c0_35, %55, %c0_36, %c0_37] : memref<1x8x2x128xbf16, #tpu.memory_space<vmem>>, vector<1x1x2x128xbf16>
      %57 = vector.shape_cast %56 : vector<1x1x2x128xbf16> to vector<2x128xbf16>
      %58 = vector.shape_cast %54 : vector<2x128xbf16> to vector<1x1x2x128xbf16>
      tpu.vector_store %arg6[%c0_35, %55, %c0_36, %c0_37], %58 {strides = array<i32>} : memref<1x8x2x128xbf16, #tpu.memory_space<vmem>>, vector<1x1x2x128xbf16>,
    }
    %c0_8 = arith.constant 0 : index
    %c0_9 = arith.constant 0 : index
    %8 = vector.load %arg9[%c0_8, %c0_9] : memref<2x128xf32, #tpu.memory_space<vmem>>, vector<2x128xf32>
    %c0_10 = arith.constant 0 : index
    %c0_11 = arith.constant 0 : index
    %c0_12 = arith.constant 0 : index
    %9 = vector.load %arg7[%c0_10, %c0_11, %c0_12] : memref<1x2x128xf32, #tpu.memory_space<vmem>>, vector<1x2x128xf32>
    %10 = vector.shape_cast %9 : vector<1x2x128xf32> to vector<2x128xf32>
    %11 = vector.shape_cast %8 : vector<2x128xf32> to vector<1x2x128xf32>
    tpu.vector_store %arg7[%c0_10, %c0_11, %c0_12], %11 {strides = array<i32>} : memref<1x2x128xf32, #tpu.memory_space<vmem>>, vector<1x2x128xf32>,
    %c0_13 = arith.constant 0 : index
    %c0_14 = arith.constant 0 : index
    %12 = vector.load %arg10[%c0_13, %c0_14] : memref<2x128xf32, #tpu.memory_space<vmem>>, vector<2x128xf32>
    %c0_15 = arith.constant 0 : index
    %c0_16 = arith.constant 0 : index
    %c0_17 = arith.constant 0 : index
    %13 = vector.load %arg8[%c0_15, %c0_16, %c0_17] : memref<1x2x128xf32, #tpu.memory_space<vmem>>, vector<1x2x128xf32>
    %14 = vector.shape_cast %13 : vector<1x2x128xf32> to vector<2x128xf32>
    %15 = vector.shape_cast %12 : vector<2x128xf32> to vector<1x2x128xf32>
    tpu.vector_store %arg8[%c0_15, %c0_16, %c0_17], %15 {strides = array<i32>} : memref<1x2x128xf32, #tpu.memory_space<vmem>>, vector<1x2x128xf32>,
    return
  }
  func.func @transform_0(%arg0: i32, %arg1: memref<2xi32, #tpu.memory_space<smem>>) -> (i32, i32, i32, i32) {
    %c0_i32 = arith.constant 0 : i32
    %c0_i32_0 = arith.constant 0 : i32
    %c0_i32_1 = arith.constant 0 : i32
    %c0_i32_2 = arith.constant 0 : i32
    return %arg0, %c0_i32, %c0_i32_0, %c0_i32_1 : i32, i32, i32, i32
  }
  func.func @transform_1(%arg0: i32, %arg1: memref<2xi32, #tpu.memory_space<smem>>) -> (i32, i32) {
    %c0_i32 = arith.constant 0 : i32
    %c0_i32_0 = arith.constant 0 : i32
    %c0_i32_1 = arith.constant 0 : i32
    return %c0_i32, %c0_i32_0 : i32, i32
  }
  func.func @transform_2(%arg0: i32, %arg1: memref<2xi32, #tpu.memory_space<smem>>) -> (i32, i32) {
    %c0_i32 = arith.constant 0 : i32
    %c0_i32_0 = arith.constant 0 : i32
    %c0_i32_1 = arith.constant 0 : i32
    return %c0_i32, %c0_i32_0 : i32, i32
  }
  func.func @transform_3(%arg0: i32, %arg1: memref<2xi32, #tpu.memory_space<smem>>) -> (i32, i32, i32) {
    %c0_i32 = arith.constant 0 : i32
    %c0_i32_0 = arith.constant 0 : i32
    %c0_i32_1 = arith.constant 0 : i32
    return %arg0, %c0_i32, %c0_i32_0 : i32, i32, i32
  }
  func.func @transform_4(%arg0: i32, %arg1: memref<2xi32, #tpu.memory_space<smem>>) -> (i32, i32, i32, i32) {
    %c0_i32 = arith.constant 0 : i32
    %c0_i32_0 = arith.constant 0 : i32
    %c0_i32_1 = arith.constant 0 : i32
    %c0_i32_2 = arith.constant 0 : i32
    return %arg0, %c0_i32, %c0_i32_0, %c0_i32_1 : i32, i32, i32, i32
  }
  func.func @transform_5(%arg0: i32, %arg1: memref<2xi32, #tpu.memory_space<smem>>) -> (i32, i32, i32) {
    %c0_i32 = arith.constant 0 : i32
    %c0_i32_0 = arith.constant 0 : i32
    %c0_i32_1 = arith.constant 0 : i32
    return %arg0, %c0_i32, %c0_i32_0 : i32, i32, i32
  }
  func.func @transform_6(%arg0: i32, %arg1: memref<2xi32, #tpu.memory_space<smem>>) -> (i32, i32, i32) {
    %c0_i32 = arith.constant 0 : i32
    %c0_i32_0 = arith.constant 0 : i32
    %c0_i32_1 = arith.constant 0 : i32
    return %arg0, %c0_i32, %c0_i32_0 : i32, i32, i32
  }
}

</mosaic_0001>

<llo_original>
// kernel: tpu_custom_call.1
$region0: #{tpu_custom_call.1}
  #allocation0 [shape = 'u32[]', space=smem, size = 0x4, offset = 0x4, fixed_abs, tag = 'smem constant byte address 0x4 - core index']
  #allocation1 [shape = 'u32[144,128]{1,0:T(1,128)}', space=vmem, size = 0x12000, scoped, tag = 'internal scratch']
  #allocation2 [shape = 'f32[2,128]{1,0:T(2,128)}', space=vmem, size = 0x400, scoped, tag = 'scratch operand']
  #allocation3 [shape = 'f32[2,128]{1,0:T(2,128)}', space=vmem, size = 0x400, scoped, tag = 'scratch operand']
  #allocation4 [shape = 's32[1]{0}', space=sflag, size = 0x4, scoped, tag = 'scoped memory for tpu_custom_call.1']
  #allocation5 [shape = 'u8[512]{0}', space=smem, size = 0x200, scoped, tag = 'prefetched SMEM operand 0']
  %s0 = inlined_call_operand.hbm [shape: s32[2], index: 0, kind: input, shape index: {}]
  %s1 = inlined_call_operand.hbm [shape: bf16[2,8,2,512], index: 1, kind: input, shape index: {}]
  %s2 = inlined_call_operand.vmem [shape: f32[2,128], index: 2, kind: input, shape index: {}]
  %s3 = inlined_call_operand.vmem [shape: f32[2,128], index: 3, kind: input, shape index: {}]
  %s4 = inlined_call_operand.hbm [shape: bf16[2,128,512], index: 4, kind: input, shape index: {}]
  %s5 = inlined_call_operand.hbm [shape: bf16[2,8,2,128], index: 5, kind: output, shape index: {0}]
  %s6 = inlined_call_operand.hbm [shape: f32[2,2,128], index: 6, kind: output, shape index: {1}]
  %s7 = inlined_call_operand.hbm [shape: f32[2,2,128], index: 7, kind: output, shape index: {2}]
  %8 = xla_tuple %s5, %s6, %s7
  %s9 = sld [smem:[#allocation0]]
  $region80: #{tpu_custom_call.1} parent=0
    _
  %s11 = ssub.s32 1, %s9
  %s12 = scalar_select 0, %s11, %s9
  %14 = dma.hbm_to_smem %s0, 16, [#allocation5], [#allocation4]
  %15 = dma.done [#allocation4], 16
  %16 = sfence
  $region1: #{tpu_custom_call.1} parent=0
    #allocation6 [shape = 'u8[32768]{0}', space=vmem, size = 0x8000, scoped, tag = 'input window, operand 1']
    #allocation7 [shape = 's32[2]{0}', space=sflag, size = 0x8, scoped, tag = 'scoped memory for tpu_custom_call.1']
    #allocation8 [shape = 's32[2]{0}', space=sflag, size = 0x8, scoped, tag = 'scoped memory for tpu_custom_call.1']
    #allocation9 [shape = 'u8[262144]{0}', space=vmem, size = 0x40000, scoped, tag = 'input window, operand 4']
    #allocation10 [shape = 's32[2]{0}', space=sflag, size = 0x8, scoped, tag = 'scoped memory for tpu_custom_call.1']
    #allocation11 [shape = 'u8[8192]{0}', space=vmem, size = 0x2000, scoped, tag = 'output window, operand 0']
    #allocation12 [shape = 'u8[2048]{0}', space=vmem, size = 0x800, scoped, tag = 'output window, operand 1']
    #allocation13 [shape = 's32[2]{0}', space=sflag, size = 0x8, scoped, tag = 'scoped memory for tpu_custom_call.1']
    #allocation14 [shape = 'u8[2048]{0}', space=vmem, size = 0x800, scoped, tag = 'output window, operand 2']
    %17 = vsyncpa [#allocation7], 0
    %s18 = scalar_lea.sflag [#allocation7], 1
    %19 = vsyncpa %s18, 0
    %20 = vsyncpa [#allocation10], 0
    %s21 = scalar_lea.sflag [#allocation10], 1
    %22 = vsyncpa %s21, 0
    %23 = vsyncpa [#allocation8], 0
    %s24 = scalar_lea.sflag [#allocation8], 1
    %25 = vsyncpa %s24, 0
    %26 = vsyncpa [#allocation13], 0
    %s27 = scalar_lea.sflag [#allocation13], 1
    %28 = vsyncpa %s27, 0
    loop: start=0, step=1, limit=4
    $region2: #{tpu_custom_call.1} parent=1 // loop_pre_header
      _
    $region3: #{tpu_custom_call.1} parent=1 // loop_header
      %s30 = sphi 0, %s34
      %p31 = scmp.ge.s32.totalorder %s30, 4
      %s40 = sphi 0, %s42
      %s43 = sphi 0, %s40
      %s44 = sphi 0, %s43
      %s60 = sphi 0, %s44
      %s64 = sphi 0, %s64
      %s66 = sphi 0, %s64
      %s67 = sphi 0, %s66
      %s81 = sphi 0, %s67
      %s85 = sphi 0, %s85
      %s87 = sphi 0, %s85
      %s88 = sphi 0, %s87
      %s102 = sphi 0, %s88
      %s108 = sphi 0, %s110
      %s111 = sphi 0, %s108
      %s112 = sphi 0, %s111
      %s128 = sphi 0, %s112
      %s134 = sphi 0, %s136
      %s137 = sphi 0, %s134
      %s138 = sphi 0, %s137
      %s154 = sphi 0, %s138
      %s160 = sphi 0, %s162
      %s163 = sphi 0, %s160
      %s164 = sphi 0, %s163
      %s180 = sphi 0, %s164
      %s186 = sphi 0, %s188
      %s189 = sphi 0, %s186
      %s190 = sphi 0, %s189
      %s206 = sphi 0, %s190
    $region4: #{tpu_custom_call.1} parent=1 // loop_header_branch
      %33 = sbr.rel (%p31) target = $region8
    $region5: #{tpu_custom_call.1} parent=1 // loop_body
      %s35 = ssub.s32 %s30, 1
      %s36 = ssub.s32 %s30, 2
      %s37 = sadd.s32 %s30, 1
      %s38 = ssub.s32 %s30, %s37
      %p39 = scmp.eq.s32.totalorder %s38, 0
      %s41 = sadd.s32 %s40, 1
      %s42 = scalar_select %p39, %s40, %s41
      %p45 = pneg %p39
      %p46 = scmp.eq.s32.totalorder %s30, 1
      %p47 = por %p45, %p46
      %p48 = scmp.ne.s32.totalorder %s40, %s43
      %p49 = scmp.eq.s32.totalorder %s30, 0
      %p50 = por %p48, %p49
      %p51 = scmp.ne.s32.totalorder %s40, %s43
      %p52 = scmp.eq.s32.totalorder %s35, 1
      %p53 = por %p51, %p52
      %p54 = scmp.ne.s32.totalorder %s43, %s44
      %p55 = scmp.eq.s32.totalorder %s35, 0
      %p56 = por %p54, %p55
      %p57 = scmp.ne.s32.totalorder %s43, %s44
      %p58 = scmp.eq.s32.totalorder %s36, 1
      %p59 = por %p57, %p58
      %p61 = scmp.ne.s32.totalorder %s44, %s60
      %p62 = scmp.eq.s32.totalorder %s36, 0
      %p63 = por %p61, %p62
      %s65 = sadd.s32 %s64, 1
      %p68 = scmp.eq.s32.totalorder %s30, 1
      %p69 = scmp.ne.s32.totalorder %s64, %s66
      %p70 = scmp.eq.s32.totalorder %s30, 0
      %p71 = por %p69, %p70
      %p72 = scmp.ne.s32.totalorder %s64, %s66
      %p73 = scmp.eq.s32.totalorder %s35, 1
      %p74 = por %p72, %p73
      %p75 = scmp.ne.s32.totalorder %s66, %s67
      %p76 = scmp.eq.s32.totalorder %s35, 0
      %p77 = por %p75, %p76
      %p78 = scmp.ne.s32.totalorder %s66, %s67
      %p79 = scmp.eq.s32.totalorder %s36, 1
      %p80 = por %p78, %p79
      %p82 = scmp.ne.s32.totalorder %s67, %s81
      %p83 = scmp.eq.s32.totalorder %s36, 0
      %p84 = por %p82, %p83
      %s86 = sadd.s32 %s85, 1
      %p89 = scmp.eq.s32.totalorder %s30, 1
      %p90 = scmp.ne.s32.totalorder %s85, %s87
      %p91 = scmp.eq.s32.totalorder %s30, 0
      %p92 = por %p90, %p91
      %p93 = scmp.ne.s32.totalorder %s85, %s87
      %p94 = scmp.eq.s32.totalorder %s35, 1
      %p95 = por %p93, %p94
      %p96 = scmp.ne.s32.totalorder %s87, %s88
      %p97 = scmp.eq.s32.totalorder %s35, 0
      %p98 = por %p96, %p97
      %p99 = scmp.ne.s32.totalorder %s87, %s88
      %p100 = scmp.eq.s32.totalorder %s36, 1
      %p101 = por %p99, %p100
      %p103 = scmp.ne.s32.totalorder %s88, %s102
      %p104 = scmp.eq.s32.totalorder %s36, 0
      %p105 = por %p103, %p104
      %s106 = ssub.s32 %s30, %s37
      %p107 = scmp.eq.s32.totalorder %s106, 0
      %s109 = sadd.s32 %s108, 1
      %s110 = scalar_select %p107, %s108, %s109
      %p113 = pneg %p107
      %p114 = scmp.eq.s32.totalorder %s30, 1
      %p115 = por %p113, %p114
      %p116 = scmp.ne.s32.totalorder %s108, %s111
      %p117 = scmp.eq.s32.totalorder %s30, 0
      %p118 = por %p116, %p117
      %p119 = scmp.ne.s32.totalorder %s108, %s111
      %p120 = scmp.eq.s32.totalorder %s35, 1
      %p121 = por %p119, %p120
      %p122 = scmp.ne.s32.totalorder %s111, %s112
      %p123 = scmp.eq.s32.totalorder %s35, 0
      %p124 = por %p122, %p123
      %p125 = scmp.ne.s32.totalorder %s111, %s112
      %p126 = scmp.eq.s32.totalorder %s36, 1
      %p127 = por %p125, %p126
      %p129 = scmp.ne.s32.totalorder %s112, %s128
      %p130 = scmp.eq.s32.totalorder %s36, 0
      %p131 = por %p129, %p130
      %s132 = ssub.s32 %s30, %s37
      %p133 = scmp.eq.s32.totalorder %s132, 0
      %s135 = sadd.s32 %s134, 1
      %s136 = scalar_select %p133, %s134, %s135
      %p139 = pneg %p133
      %p140 = scmp.eq.s32.totalorder %s30, 1
      %p141 = por %p139, %p140
      %p142 = scmp.ne.s32.totalorder %s134, %s137
      %p143 = scmp.eq.s32.totalorder %s30, 0
      %p144 = por %p142, %p143
      %p145 = scmp.ne.s32.totalorder %s134, %s137
      %p146 = scmp.eq.s32.totalorder %s35, 1
      %p147 = por %p145, %p146
      %p148 = scmp.ne.s32.totalorder %s137, %s138
      %p149 = scmp.eq.s32.totalorder %s35, 0
      %p150 = por %p148, %p149
      %p151 = scmp.ne.s32.totalorder %s137, %s138
      %p152 = scmp.eq.s32.totalorder %s36, 1
      %p153 = por %p151, %p152
      %p155 = scmp.ne.s32.totalorder %s138, %s154
      %p156 = scmp.eq.s32.totalorder %s36, 0
      %p157 = por %p155, %p156
      %s158 = ssub.s32 %s30, %s37
      %p159 = scmp.eq.s32.totalorder %s158, 0
      %s161 = sadd.s32 %s160, 1
      %s162 = scalar_select %p159, %s160, %s161
      %p165 = pneg %p159
      %p166 = scmp.eq.s32.totalorder %s30, 1
      %p167 = por %p165, %p166
      %p168 = scmp.ne.s32.totalorder %s160, %s163
      %p169 = scmp.eq.s32.totalorder %s30, 0
      %p170 = por %p168, %p169
      %p171 = scmp.ne.s32.totalorder %s160, %s163
      %p172 = scmp.eq.s32.totalorder %s35, 1
      %p173 = por %p171, %p172
      %p174 = scmp.ne.s32.totalorder %s163, %s164
      %p175 = scmp.eq.s32.totalorder %s35, 0
      %p176 = por %p174, %p175
      %p177 = scmp.ne.s32.totalorder %s163, %s164
      %p178 = scmp.eq.s32.totalorder %s36, 1
      %p179 = por %p177, %p178
      %p181 = scmp.ne.s32.totalorder %s164, %s180
      %p182 = scmp.eq.s32.totalorder %s36, 0
      %p183 = por %p181, %p182
      %s184 = ssub.s32 %s30, %s37
      %p185 = scmp.eq.s32.totalorder %s184, 0
      %s187 = sadd.s32 %s186, 1
      %s188 = scalar_select %p185, %s186, %s187
      %p191 = pneg %p185
      %p192 = scmp.eq.s32.totalorder %s30, 1
      %p193 = por %p191, %p192
      %p194 = scmp.ne.s32.totalorder %s186, %s189
      %p195 = scmp.eq.s32.totalorder %s30, 0
      %p196 = por %p194, %p195
      %p197 = scmp.ne.s32.totalorder %s186, %s189
      %p198 = scmp.eq.s32.totalorder %s35, 1
      %p199 = por %p197, %p198
      %p200 = scmp.ne.s32.totalorder %s189, %s190
      %p201 = scmp.eq.s32.totalorder %s35, 0
      %p202 = por %p200, %p201
      %p203 = scmp.ne.s32.totalorder %s189, %s190
      %p204 = scmp.eq.s32.totalorder %s36, 1
      %p205 = por %p203, %p204
      %p207 = scmp.ne.s32.totalorder %s190, %s206
      %p208 = scmp.eq.s32.totalorder %s36, 0
      %p209 = por %p207, %p208
      %p210 = scmp.le.s32.totalorder 1, %s30
      %p211 = scmp.lt.s32.totalorder %s30, 3
      %p212 = pnand %p210, %p211
      %p213 = pneg %p212
      // Predicated region
      $region9: #{tpu_custom_call.1} parent=5 // pred_check
        _
      $region10: #{tpu_custom_call.1} parent=5 // pred_check_branch
        %215 = sbr.rel (%p212) target = $region12
      $region11: #{tpu_custom_call.1} parent=5 // pred_region
        %s216 = ssub.s32 %s30, 1
        // Predicated region
        $region13: #{tpu_custom_call.1} parent=11 // pred_check
          %p217 = pneg %p77
        $region14: #{tpu_custom_call.1} parent=11 // pred_check_branch
          %219 = sbr.rel (%p217) target = $region16
        $region15: #{tpu_custom_call.1} parent=11 // pred_region
          _
        $region16: #{tpu_custom_call.1} parent=11 // pred_fallthru
          _
        // Predicated region
        $region17: #{tpu_custom_call.1} parent=11 // pred_check
          %p220 = pneg %p98
        $region18: #{tpu_custom_call.1} parent=11 // pred_check_branch
          %222 = sbr.rel (%p220) target = $region20
        $region19: #{tpu_custom_call.1} parent=11 // pred_region
          _
        $region20: #{tpu_custom_call.1} parent=11 // pred_fallthru
          _
      $region12: #{tpu_custom_call.1} parent=5 // pred_fallthru
        _
      %p223 = scmp.lt.s32.totalorder %s30, 2
      // Predicated region
      $region21: #{tpu_custom_call.1} parent=5 // pred_check
        %p224 = pneg %p223
      $region22: #{tpu_custom_call.1} parent=5 // pred_check_branch
        %226 = sbr.rel (%p224) target = $region24
      $region23: #{tpu_custom_call.1} parent=5 // pred_region
        // Predicated region
        $region25: #{tpu_custom_call.1} parent=23 // pred_check
          %p227 = pneg %p50
        $region26: #{tpu_custom_call.1} parent=23 // pred_check_branch
          %229 = sbr.rel (%p227) target = $region28
        $region27: #{tpu_custom_call.1} parent=23 // pred_region
          %s230 = sand.u32 %s40, 1
          %s231 = scalar_lea.sflag [#allocation7], %s230
          %s232 = sand.u32 %s40, 1
          %s233 = smul.addr %s232, 32
          %s234 = scalar_lea.vmem [#allocation6], %s233
          %s236 = ssub.s32 512, 512
          %237 = vsyncadd %s231, %s236
          %s238 = smul.addr %s30, 32
          %s239 = smul.addr %s238, 16
          %s240 = scalar_lea.hbm %s1, %s239
          %s241 = sshll.u32 %s234, 4
          %s242 = int_to_ptr.vmem [resolvable:$true] %s241
          %247 = dma.hbm_to_vmem [thread:$0]  %s240, 512, %s242, %s231, 64, 64, 4
        $region28: #{tpu_custom_call.1} parent=23 // pred_fallthru
          _
        // Predicated region
        $region29: #{tpu_custom_call.1} parent=23 // pred_check
          %p248 = pneg %p118
        $region30: #{tpu_custom_call.1} parent=23 // pred_check_branch
          %250 = sbr.rel (%p248) target = $region32
        $region31: #{tpu_custom_call.1} parent=23 // pred_region
          %s251 = sand.u32 %s108, 1
          %s252 = scalar_lea.sflag [#allocation10], %s251
          %s253 = sand.u32 %s108, 1
          %s254 = smul.addr %s253, 256
          %s255 = scalar_lea.vmem [#allocation9], %s254
          %s257 = ssub.s32 4096, 4096
          %258 = vsyncadd %s252, %s257
          %s259 = smul.addr %s30, 64
          %s260 = smul.addr %s259, 64
          %s261 = scalar_lea.hbm %s4, %s260
          %s262 = sshll.u32 %s255, 4
          %s263 = int_to_ptr.vmem [resolvable:$true] %s262
          %268 = dma.hbm_to_vmem [thread:$0]  %s261, 4096, %s263, %s252, 256, 256, 16
        $region32: #{tpu_custom_call.1} parent=23 // pred_fallthru
          _
      $region24: #{tpu_custom_call.1} parent=5 // pred_fallthru
        _
      %p269 = scmp.le.s32.totalorder 1, %s30
      %p270 = scmp.lt.s32.totalorder %s30, 3
      %p271 = pnand %p269, %p270
      %p272 = pneg %p271
      // Predicated region
      $region33: #{tpu_custom_call.1} parent=5 // pred_check
        _
      $region34: #{tpu_custom_call.1} parent=5 // pred_check_branch
        %274 = sbr.rel (%p271) target = $region36
      $region35: #{tpu_custom_call.1} parent=5 // pred_region
        %s275 = ssub.s32 %s30, 1
        %s276 = sand.u32 %s43, 1
        %s277 = scalar_lea.sflag [#allocation7], %s276
        %s278 = sand.u32 %s43, 1
        %s279 = smul.addr %s278, 32
        %s280 = scalar_lea.vmem [#allocation6], %s279
        // Predicated region
        $region37: #{tpu_custom_call.1} parent=35 // pred_check
          %p281 = pneg %p56
        $region38: #{tpu_custom_call.1} parent=35 // pred_check_branch
          %283 = sbr.rel (%p281) target = $region40
        $region39: #{tpu_custom_call.1} parent=35 // pred_region
          %284 = dma.done %s277, 512
        $region40: #{tpu_custom_call.1} parent=35 // pred_fallthru
          _
        %s285 = sand.u32 %s111, 1
        %s286 = scalar_lea.sflag [#allocation10], %s285
        %s287 = sand.u32 %s111, 1
        %s288 = smul.addr %s287, 256
        %s289 = scalar_lea.vmem [#allocation9], %s288
        // Predicated region
        $region41: #{tpu_custom_call.1} parent=35 // pred_check
          %p290 = pneg %p124
        $region42: #{tpu_custom_call.1} parent=35 // pred_check_branch
          %292 = sbr.rel (%p290) target = $region44
        $region43: #{tpu_custom_call.1} parent=35 // pred_region
          %293 = dma.done %s286, 4096
        $region44: #{tpu_custom_call.1} parent=35 // pred_fallthru
          _
        %s294 = sand.u32 %s43, 1
        %s295 = scalar_lea.sflag [#allocation7], %s294
        %s296 = sand.u32 %s43, 1
        %s297 = smul.addr %s296, 32
        %s298 = scalar_lea.vmem [#allocation6], %s297
        %p299 = pneg %p56
        %p300 = pneg %p53
        %p301 = pneg %p77
        %p302 = pneg %p74
        %p303 = pneg %p98
        %p304 = pneg %p95
        %s305 = sand.u32 %s111, 1
        %s306 = scalar_lea.sflag [#allocation10], %s305
        %s307 = sand.u32 %s111, 1
        %s308 = smul.addr %s307, 256
        %s309 = scalar_lea.vmem [#allocation9], %s308
        %p310 = pneg %p124
        %p311 = pneg %p121
        %p312 = pneg %p150
        %p313 = pneg %p147
        %s314 = sand.u32 %s137, 1
        %s315 = scalar_lea.sflag [#allocation8], %s314
        %s316 = sand.u32 %s137, 1
        %s317 = smul.addr %s316, 8
        %s318 = scalar_lea.vmem [#allocation11], %s317
        %p319 = pneg %p176
        %p320 = pneg %p173
        %s321 = sand.u32 %s35, 1
        %s322 = scalar_lea.sflag [#allocation13], %s321
        %s323 = sand.u32 %s163, 1
        %s324 = smul.addr %s323, 2
        %s325 = scalar_lea.vmem [#allocation12], %s324
        %p326 = pneg %p202
        %p327 = pneg %p199
        %s328 = sand.u32 %s35, 1
        %s329 = scalar_lea.sflag [#allocation13], %s328
        %s330 = sand.u32 %s189, 1
        %s331 = smul.addr %s330, 2
        %s332 = scalar_lea.vmem [#allocation14], %s331
        %s334 = sld [smem:[#allocation5 + %s35]]
        %v335 = vld [vmem:[%s2] sm:$0x3]
        %336 = vst [vmem:[#allocation2] sm:$0x3] %v335
        %v337 = vld [vmem:[%s3] sm:$0x3]
        %338 = vst [vmem:[#allocation3] sm:$0x3] %v337
        // While loop
        $region45: #{tpu_custom_call.1} parent=35 // loop_pre_header
          _
        $region46: #{tpu_custom_call.1} parent=35 // loop_header
          %s340 = sphi 0, %s342
          %p341 = scmp.ge.s32.totalorder %s340, %s334
        $region47: #{tpu_custom_call.1} parent=35 // loop_header_branch
          %344 = sbr.rel (%p341) target = $region51
        $region48: #{tpu_custom_call.1} parent=35 // loop_body
          %v345 = vld [vmem:[#allocation2] sm:$0x3]
          %v346 = vld [vmem:[#allocation3] sm:$0x3]
          %s347 = smul.u32 %s340, 4
          %s348 = scalar_lea.vmem %s280, %s347 [#allocation6]
          %v349 = vld [vmem:[%s348] sm:$0xf]
          %v350 = vunpack.c.l.bf16 %v349
          %v351 = vpack.c.bf16 %v345, %v345
          %v352 = vld [vmem:[%s289] sm:$0xff]
          %v353 = vld [vmem:[%s289 + $0x8] sm:$0xff]
          %v354 = vld [vmem:[%s289 + $0x10] sm:$0xff]
          %v355 = vld [vmem:[%s289 + $0x18] sm:$0xff]
          %v356 = vld [vmem:[%s289 + $0x20] sm:$0xff]
          %v357 = vld [vmem:[%s289 + $0x28] sm:$0xff]
          %v358 = vld [vmem:[%s289 + $0x30] sm:$0xff]
          %v359 = vld [vmem:[%s289 + $0x38] sm:$0xff]
          %v360 = vld [vmem:[%s289 + $0x40] sm:$0xff]
          %v361 = vld [vmem:[%s289 + $0x48] sm:$0xff]
          %v362 = vld [vmem:[%s289 + $0x50] sm:$0xff]
          %v363 = vld [vmem:[%s289 + $0x58] sm:$0xff]
          %v364 = vld [vmem:[%s289 + $0x60] sm:$0xff]
          %v365 = vld [vmem:[%s289 + $0x68] sm:$0xff]
          %v366 = vld [vmem:[%s289 + $0x70] sm:$0xff]
          %v367 = vld [vmem:[%s289 + $0x78] sm:$0xff]
          %v368 = vld [vmem:[%s289 + $0x80] sm:$0xff]
          %v369 = vld [vmem:[%s289 + $0x88] sm:$0xff]
          %v370 = vld [vmem:[%s289 + $0x90] sm:$0xff]
          %v371 = vld [vmem:[%s289 + $0x98] sm:$0xff]
          %v372 = vld [vmem:[%s289 + $0xa0] sm:$0xff]
          %v373 = vld [vmem:[%s289 + $0xa8] sm:$0xff]
          %v374 = vld [vmem:[%s289 + $0xb0] sm:$0xff]
          %v375 = vld [vmem:[%s289 + $0xb8] sm:$0xff]
          %v376 = vld [vmem:[%s289 + $0xc0] sm:$0xff]
          %v377 = vld [vmem:[%s289 + $0xc8] sm:$0xff]
          %v378 = vld [vmem:[%s289 + $0xd0] sm:$0xff]
          %v379 = vld [vmem:[%s289 + $0xd8] sm:$0xff]
          %v380 = vld [vmem:[%s289 + $0xe0] sm:$0xff]
          %v381 = vld [vmem:[%s289 + $0xe8] sm:$0xff]
          %v382 = vld [vmem:[%s289 + $0xf0] sm:$0xff]
          %v383 = vld [vmem:[%s289 + $0xf8] sm:$0xff]
          %v416 = vunpack.c.l.b16 %v352
          %v417 = vunpack.c.h.b16 %v352
          %v418 = vunpack.c.l.b16 %v353
          %v419 = vunpack.c.h.b16 %v353
          %v420 = vunpack.c.l.b16 %v354
          %v421 = vunpack.c.h.b16 %v354
          %v422 = vunpack.c.l.b16 %v355
          %v423 = vunpack.c.h.b16 %v355
          %v424 = vunpack.c.l.b16 %v356
          %v425 = vunpack.c.h.b16 %v356
          %v426 = vunpack.c.l.b16 %v357
          %v427 = vunpack.c.h.b16 %v357
          %v428 = vunpack.c.l.b16 %v358
          %v429 = vunpack.c.h.b16 %v358
          %v430 = vunpack.c.l.b16 %v359
          %v431 = vunpack.c.h.b16 %v359
          %v432 = vunpack.c.l.b16 %v360
          %v433 = vunpack.c.h.b16 %v360
          %v434 = vunpack.c.l.b16 %v361
          %v435 = vunpack.c.h.b16 %v361
          %v436 = vunpack.c.l.b16 %v362
          %v437 = vunpack.c.h.b16 %v362
          %v438 = vunpack.c.l.b16 %v363
          %v439 = vunpack.c.h.b16 %v363
          %v440 = vunpack.c.l.b16 %v364
          %v441 = vunpack.c.h.b16 %v364
          %v442 = vunpack.c.l.b16 %v365
          %v443 = vunpack.c.h.b16 %v365
          %v444 = vunpack.c.l.b16 %v366
          %v445 = vunpack.c.h.b16 %v366
          %v446 = vunpack.c.l.b16 %v367
          %v447 = vunpack.c.h.b16 %v367
          %v448 = vunpack.c.l.b16 %v368
          %v449 = vunpack.c.h.b16 %v368
          %v450 = vunpack.c.l.b16 %v369
          %v451 = vunpack.c.h.b16 %v369
          %v452 = vunpack.c.l.b16 %v370
          %v453 = vunpack.c.h.b16 %v370
          %v454 = vunpack.c.l.b16 %v371
          %v455 = vunpack.c.h.b16 %v371
          %v456 = vunpack.c.l.b16 %v372
          %v457 = vunpack.c.h.b16 %v372
          %v458 = vunpack.c.l.b16 %v373
          %v459 = vunpack.c.h.b16 %v373
          %v460 = vunpack.c.l.b16 %v374
          %v461 = vunpack.c.h.b16 %v374
          %v462 = vunpack.c.l.b16 %v375
          %v463 = vunpack.c.h.b16 %v375
          %v464 = vunpack.c.l.b16 %v376
          %v465 = vunpack.c.h.b16 %v376
          %v466 = vunpack.c.l.b16 %v377
          %v467 = vunpack.c.h.b16 %v377
          %v468 = vunpack.c.l.b16 %v378
          %v469 = vunpack.c.h.b16 %v378
          %v470 = vunpack.c.l.b16 %v379
          %v471 = vunpack.c.h.b16 %v379
          %v472 = vunpack.c.l.b16 %v380
          %v473 = vunpack.c.h.b16 %v380
          %v474 = vunpack.c.l.b16 %v381
          %v475 = vunpack.c.h.b16 %v381
          %v476 = vunpack.c.l.b16 %v382
          %v477 = vunpack.c.h.b16 %v382
          %v478 = vunpack.c.l.b16 %v383
          %v479 = vunpack.c.h.b16 %v383
          %v480 = vpack.c.b16 %v420, %v416
          %v481 = vpack.c.b16 %v421, %v417
          %v482 = vpack.c.b16 %v422, %v418
          %v483 = vpack.c.b16 %v423, %v419
          %v484 = vpack.c.b16 %v428, %v424
          %v485 = vpack.c.b16 %v429, %v425
          %v486 = vpack.c.b16 %v430, %v426
          %v487 = vpack.c.b16 %v431, %v427
          %v488 = vpack.c.b16 %v436, %v432
          %v489 = vpack.c.b16 %v437, %v433
          %v490 = vpack.c.b16 %v438, %v434
          %v491 = vpack.c.b16 %v439, %v435
          %v492 = vpack.c.b16 %v444, %v440
          %v493 = vpack.c.b16 %v445, %v441
          %v494 = vpack.c.b16 %v446, %v442
          %v495 = vpack.c.b16 %v447, %v443
          %v496 = vpack.c.b16 %v452, %v448
          %v497 = vpack.c.b16 %v453, %v449
          %v498 = vpack.c.b16 %v454, %v450
          %v499 = vpack.c.b16 %v455, %v451
          %v500 = vpack.c.b16 %v460, %v456
          %v501 = vpack.c.b16 %v461, %v457
          %v502 = vpack.c.b16 %v462, %v458
          %v503 = vpack.c.b16 %v463, %v459
          %v504 = vpack.c.b16 %v468, %v464
          %v505 = vpack.c.b16 %v469, %v465
          %v506 = vpack.c.b16 %v470, %v466
          %v507 = vpack.c.b16 %v471, %v467
          %v508 = vpack.c.b16 %v476, %v472
          %v509 = vpack.c.b16 %v477, %v473
          %v510 = vpack.c.b16 %v478, %v474
          %v511 = vpack.c.b16 %v479, %v475
          %544 = vmatprep.subr.bf16.mxu0 %v509
          %545 = vmatpush1.bf16.msra.mxu0 %v508
          %546 = vmatprep.subr.bf16.mxu0 %v505
          %547 = vmatpush1.bf16.msra.mxu0 %v504
          %548 = vmatprep.subr.bf16.mxu0 %v501
          %549 = vmatpush1.bf16.msra.mxu0 %v500
          %550 = vmatprep.subr.bf16.mxu0 %v497
          %551 = vmatpush1.bf16.msra.mxu0 %v496
          %552 = vmatprep.subr.bf16.mxu0 %v493
          %553 = vmatpush1.bf16.msra.mxu0 %v492
          %554 = vmatprep.subr.bf16.mxu0 %v489
          %555 = vmatpush1.bf16.msra.mxu0 %v488
          %556 = vmatprep.subr.bf16.mxu0 %v485
          %557 = vmatpush1.bf16.msra.mxu0 %v484
          %558 = vmatprep.subr.bf16.mxu0 %v481
          %559 = vmatpush1.bf16.msra.mxu0 %v480
          %560 = vmatprep.subr.bf16.mxu0 0
          %561 = vmatpush2.bf16.msra.mxu0 0
          %562 = vmatprep.subr.bf16.mxu0 0
          %563 = vmatpush2.bf16.msra.mxu0 0
          %564 = vmatprep.subr.bf16.mxu0 0
          %565 = vmatpush2.bf16.msra.mxu0 0
          %566 = vmatprep.subr.bf16.mxu0 0
          %567 = vmatpush2.bf16.msra.mxu0 0
          %568 = vmatprep.subr.bf16.mxu0 0
          %569 = vmatpush2.bf16.msra.mxu0 0
          %570 = vmatprep.subr.bf16.mxu0 0
          %571 = vmatpush2.bf16.msra.mxu0 0
          %572 = vmatprep.subr.bf16.mxu0 0
          %573 = vmatpush2.bf16.msra.mxu0 0
          %574 = vmatprep.subr.bf16.mxu0 0
          %575 = vmatpush2.bf16.msra.mxu0 0
          %576 = vmatprep.mubr.bf16.mxu0 0
          %577 = vmatmul.mubr.bf16.gmra.mxu0 %v351
          %v578 = vpop.f32.mrf.mxu0
          %v579 = vadd.f32 0.0, %v578
          %v580 = vpop.f32.mrf.mxu0
          %v581 = vadd.f32 0.0, %v580
          %v582 = vpop.f32.mrf.mxu0
          %v583 = vpop.f32.mrf.mxu0
          %584 = vdwg.mxu0
          %585 = vmatprep.subr.bf16.mxu0 %v511
          %586 = vmatpush1.bf16.msra.mxu0 %v510
          %587 = vmatprep.subr.bf16.mxu0 %v507
          %588 = vmatpush1.bf16.msra.mxu0 %v506
          %589 = vmatprep.subr.bf16.mxu0 %v503
          %590 = vmatpush1.bf16.msra.mxu0 %v502
          %591 = vmatprep.subr.bf16.mxu0 %v499
          %592 = vmatpush1.bf16.msra.mxu0 %v498
          %593 = vmatprep.subr.bf16.mxu0 %v495
          %594 = vmatpush1.bf16.msra.mxu0 %v494
          %595 = vmatprep.subr.bf16.mxu0 %v491
          %596 = vmatpush1.bf16.msra.mxu0 %v490
          %597 = vmatprep.subr.bf16.mxu0 %v487
          %598 = vmatpush1.bf16.msra.mxu0 %v486
          %599 = vmatprep.subr.bf16.mxu0 %v483
          %600 = vmatpush1.bf16.msra.mxu0 %v482
          %601 = vmatprep.subr.bf16.mxu0 0
          %602 = vmatpush2.bf16.msra.mxu0 0
          %603 = vmatprep.subr.bf16.mxu0 0
          %604 = vmatpush2.bf16.msra.mxu0 0
          %605 = vmatprep.subr.bf16.mxu0 0
          %606 = vmatpush2.bf16.msra.mxu0 0
          %607 = vmatprep.subr.bf16.mxu0 0
          %608 = vmatpush2.bf16.msra.mxu0 0
          %609 = vmatprep.subr.bf16.mxu0 0
          %610 = vmatpush2.bf16.msra.mxu0 0
          %611 = vmatprep.subr.bf16.mxu0 0
          %612 = vmatpush2.bf16.msra.mxu0 0
          %613 = vmatprep.subr.bf16.mxu0 0
          %614 = vmatpush2.bf16.msra.mxu0 0
          %615 = vmatprep.subr.bf16.mxu0 0
          %616 = vmatpush2.bf16.msra.mxu0 0
          %617 = vmatprep.mubr.bf16.mxu0 0
          %618 = vmatmul.mubr.bf16.gmra.mxu0 %v351
          %v619 = vpop.f32.mrf.mxu0
          %v620 = vadd.f32 0.0, %v619
          %v621 = vpop.f32.mrf.mxu0
          %v622 = vadd.f32 0.0, %v621
          %v623 = vpop.f32.mrf.mxu0
          %v624 = vpop.f32.mrf.mxu0
          %625 = vdwg.mxu0
          %v630 = vcombine.low %v579, %v581
          %v631 = vcombine.low %v620, %v622
          %v633 = vunpack.c.l.s4 1983009808
          %v634 = vunpack.c.0.s8 %v633
          %v635 = vlaneseq
          %v636 = vshrl.u32 %v635, 7
          %v637 = vsub.s32 %v634, %v636
          %v638 = vrot.slane %v630, %v637
          %v640 = vunpack.c.l.s4 1983009808
          %v641 = vunpack.c.0.s8 %v640
          %v642 = vlaneseq
          %v643 = vshrl.u32 %v642, 7
          %v644 = vsub.s32 %v641, %v643
          %v645 = vrot.slane %v631, %v644
          %v646 = vcombine.low %v638, %v645
          %v648 = vadd.f32 %v350, %v646
          %v649 = vxor.u32 %v648, 2147483648
          %v650 = vmul.f32 %v649, 1.442695
          %v651 = vpow.pop %v650
          %v652 = vadd.f32 %v651, 1.0
          %v653 = vrcp.pop %v652
          %v654 = vmul.f32 1.0, %v653
          %v656 = vrot.slane %v648, 2
          %v658 = vxor.u32 %v656, 2147483648
          %v659 = vmul.f32 %v658, 1.442695
          %v660 = vpow.pop %v659
          %v661 = vadd.f32 %v660, 1.0
          %v662 = vrcp.pop %v661
          %v663 = vmul.f32 1.0, %v662
          %v664 = vrot.slane %v648, 4
          %v666 = vtanh.pop %v664
          %v667 = vrot.slane %v648, 6
          %v669 = vxor.u32 %v667, 2147483648
          %v670 = vmul.f32 %v669, 1.442695
          %v671 = vpow.pop %v670
          %v672 = vadd.f32 %v671, 1.0
          %v673 = vrcp.pop %v672
          %v674 = vmul.f32 1.0, %v673
          %v675 = vmul.f32 %v663, %v346
          %v676 = vmul.f32 %v654, %v666
          %v677 = vadd.f32 %v675, %v676
          %v678 = vtanh.pop %v677
          %v679 = vmul.f32 %v674, %v678
          %680 = vst [vmem:[#allocation2] sm:$0x3] %v679
          %681 = vst [vmem:[#allocation3] sm:$0x3] %v677
          %v682 = vpack.c.bf16 %v679, %v679
          %s683 = scalar_lea.vmem %s318, %s340 [#allocation11]
          %684 = vst [vmem:[%s683] sm:$0x1] %v682
        $region49: #{tpu_custom_call.1} parent=35 // loop_footer
          %s342 = sadd.s32 %s340, 1
        $region50: #{tpu_custom_call.1} parent=35 // loop_footer_branch
          %339 = sbr.rel target = $region46
        $region51: #{tpu_custom_call.1} parent=35 // loop_exit
          _
        %v685 = vld [vmem:[#allocation2] sm:$0x3]
        %686 = vst [vmem:[%s325] sm:$0x3] %v685
        %v687 = vld [vmem:[#allocation3] sm:$0x3]
        %688 = vst [vmem:[%s332] sm:$0x3] %v687
        %s689 = sand.u32 %s137, 1
        %s690 = scalar_lea.sflag [#allocation8], %s689
        %s691 = sand.u32 %s137, 1
        %s692 = smul.addr %s691, 8
        %s693 = scalar_lea.vmem [#allocation11], %s692
        %s694 = sand.u32 %s35, 1
        %s695 = scalar_lea.sflag [#allocation13], %s694
        %s696 = sand.u32 %s163, 1
        %s697 = smul.addr %s696, 2
        %s698 = scalar_lea.vmem [#allocation12], %s697
        %s699 = sand.u32 %s35, 1
        %s700 = scalar_lea.sflag [#allocation13], %s699
        %s701 = sand.u32 %s189, 1
        %s702 = smul.addr %s701, 2
        %s703 = scalar_lea.vmem [#allocation14], %s702
        // Predicated region
        $region52: #{tpu_custom_call.1} parent=35 // pred_check
          %p704 = pneg %p147
        $region53: #{tpu_custom_call.1} parent=35 // pred_check_branch
          %706 = sbr.rel (%p704) target = $region55
        $region54: #{tpu_custom_call.1} parent=35 // pred_region
          %s708 = ssub.s32 128, 128
          %709 = vsyncadd %s690, %s708
          %s710 = smul.addr %s35, 8
          %s711 = smul.addr %s710, 16
          %s712 = scalar_lea.hbm %s5, %s711
          %s713 = sshll.u32 %s693, 4
          %s714 = int_to_ptr.vmem [resolvable:$true] %s713
          %719 = dma.vmem_to_hbm [thread:$0]  %s714, 128, %s712, %s690, 16, 16, 1
        $region55: #{tpu_custom_call.1} parent=35 // pred_fallthru
          _
        // Predicated region
        $region56: #{tpu_custom_call.1} parent=35 // pred_check
          %p720 = pneg %p173
        $region57: #{tpu_custom_call.1} parent=35 // pred_check_branch
          %722 = sbr.rel (%p720) target = $region59
        $region58: #{tpu_custom_call.1} parent=35 // pred_region
          %s724 = ssub.s32 32, 32
          %725 = vsyncadd %s695, %s724
          %s726 = smul.addr %s35, 32
          %s727 = scalar_lea.hbm %s6, %s726
          %s729 = sshll.u32 %s698, 4
          %s730 = int_to_ptr.vmem [resolvable:$true] %s729
          %732 = dma.vmem_to_hbm [thread:$0]  %s730, 32, %s727, %s695
        $region59: #{tpu_custom_call.1} parent=35 // pred_fallthru
          _
        // Predicated region
        $region60: #{tpu_custom_call.1} parent=35 // pred_check
          %p733 = pneg %p199
        $region61: #{tpu_custom_call.1} parent=35 // pred_check_branch
          %735 = sbr.rel (%p733) target = $region63
        $region62: #{tpu_custom_call.1} parent=35 // pred_region
          %s737 = ssub.s32 32, 32
          %738 = vsyncadd %s700, %s737
          %s739 = smul.addr %s35, 32
          %s740 = scalar_lea.hbm %s7, %s739
          %s742 = sshll.u32 %s703, 4
          %s743 = int_to_ptr.vmem [resolvable:$true] %s742
          %745 = dma.vmem_to_hbm [thread:$0]  %s743, 32, %s740, %s700
        $region63: #{tpu_custom_call.1} parent=35 // pred_fallthru
          _
      $region36: #{tpu_custom_call.1} parent=5 // pred_fallthru
        _
      %p746 = scmp.le.s32.totalorder 2, %s30
      // Predicated region
      $region64: #{tpu_custom_call.1} parent=5 // pred_check
        %p747 = pneg %p746
      $region65: #{tpu_custom_call.1} parent=5 // pred_check_branch
        %749 = sbr.rel (%p747) target = $region67
      $region66: #{tpu_custom_call.1} parent=5 // pred_region
        %s750 = ssub.s32 %s30, 2
        // Predicated region
        $region68: #{tpu_custom_call.1} parent=66 // pred_check
          %p751 = pneg %p153
        $region69: #{tpu_custom_call.1} parent=66 // pred_check_branch
          %753 = sbr.rel (%p751) target = $region71
        $region70: #{tpu_custom_call.1} parent=66 // pred_region
          %s754 = sand.u32 %s138, 1
          %s755 = scalar_lea.sflag [#allocation8], %s754
          %s756 = sand.u32 %s138, 1
          %s757 = smul.addr %s756, 8
          %s758 = scalar_lea.vmem [#allocation11], %s757
          %759 = dma.done %s755, 128
        $region71: #{tpu_custom_call.1} parent=66 // pred_fallthru
          _
        // Predicated region
        $region72: #{tpu_custom_call.1} parent=66 // pred_check
          %p760 = pneg %p179
        $region73: #{tpu_custom_call.1} parent=66 // pred_check_branch
          %762 = sbr.rel (%p760) target = $region75
        $region74: #{tpu_custom_call.1} parent=66 // pred_region
          %s763 = sand.u32 %s36, 1
          %s764 = scalar_lea.sflag [#allocation13], %s763
          %s765 = sand.u32 %s164, 1
          %s766 = smul.addr %s765, 2
          %s767 = scalar_lea.vmem [#allocation12], %s766
          %768 = dma.done %s764, 32
        $region75: #{tpu_custom_call.1} parent=66 // pred_fallthru
          _
        // Predicated region
        $region76: #{tpu_custom_call.1} parent=66 // pred_check
          %p769 = pneg %p205
        $region77: #{tpu_custom_call.1} parent=66 // pred_check_branch
          %771 = sbr.rel (%p769) target = $region79
        $region78: #{tpu_custom_call.1} parent=66 // pred_region
          %s772 = sand.u32 %s36, 1
          %s773 = scalar_lea.sflag [#allocation13], %s772
          %s774 = sand.u32 %s190, 1
          %s775 = smul.addr %s774, 2
          %s776 = scalar_lea.vmem [#allocation14], %s775
          %777 = dma.done %s773, 32
        $region79: #{tpu_custom_call.1} parent=66 // pred_fallthru
          _
      $region67: #{tpu_custom_call.1} parent=5 // pred_fallthru
        _
    $region6: #{tpu_custom_call.1} parent=1 // loop_footer
      %s34 = sadd.s32 1, %s30
    $region7: #{tpu_custom_call.1} parent=1 // loop_footer_branch
      %29 = sbr.rel target = $region3
    $region8: #{tpu_custom_call.1} parent=1 // loop_exit
      _
    %778 = vsyncpa [#allocation7], 1
    %s779 = scalar_lea.sflag [#allocation7], 1
    %780 = vsyncpa %s779, 1
    %781 = vsyncpa [#allocation10], 1
    %s782 = scalar_lea.sflag [#allocation10], 1
    %783 = vsyncpa %s782, 1
    %784 = vsyncpa [#allocation8], 1
    %s785 = scalar_lea.sflag [#allocation8], 1
    %786 = vsyncpa %s785, 1
    %787 = vsyncpa [#allocation13], 1
    %s788 = scalar_lea.sflag [#allocation13], 1
    %789 = vsyncpa %s788, 1

</llo_original>
